<compile_context>
chip_gen: v5e
topology: v5e:2x2
jax: 0.10.0
libtpu: 0.0.40
codegen_flags: <defaults>
</compile_context>

<pallas_src>
import jax
import jax.numpy as jnp
import numpy as np
from jax import lax
from jax.experimental import pallas as pl
from jax.experimental.pallas import tpu as pltpu

HIDDEN = 9
NUM_CLASSES = 10
_LANE = 128                      # lane width; conv/pool blocks are lane-aligned
_POOL_OFFSETS = (0, 1, 3, 4)     # flat offsets of the 2x2 pool window on a 3x3 map
_UNROLL_LIMIT = 64               # unroll the LSTM recurrence up to this seq length


def cnn_lstm_kernel(x_ref, a_ref, b_ref, out_ref, gx_ref):
    x_pad = x_ref[...]                                    # (B, 128); lane 64 == 1.0
    B = x_pad.shape[0]
    nc = out_ref.shape[1]

    # ---- Conv2d(1,1,3,s=2) + bias + ReLU as ONE MXU matmul.  Slab-A columns
    # 0:512 hold the flattened conv map shifted by the MaxPool window offsets
    # {0,1,3,4} in four lane-aligned 128-column blocks; row 64 is the bias row
    # (paired with the constant-1 lane 64 of x_pad).
    conv = jnp.maximum(
        jnp.dot(x_pad, a_ref[:, 0:4 * _LANE],
                preferred_element_type=jnp.float32), 0.0)          # (B, 512)

    # ---- MaxPool2d(2, stride=1): max of the 4 lane-aligned shifted copies.
    p = jnp.maximum(
        jnp.maximum(conv[:, 0:_LANE], conv[:, _LANE:2 * _LANE]),
        jnp.maximum(conv[:, 2 * _LANE:3 * _LANE], conv[:, 3 * _LANE:4 * _LANE]))

    # ---- fc1 + ReLU.  The pooled-column gather {0,1,3,4} and the fc1 bias are
    # folded into the zero-padded (128, 9) weight at slab-A columns 512:521.
    # INVARIANT: weight rows outside {0,1,3,4,127} must stay exactly zero (the
    # other lanes of p hold real, unused conv maxima); lane 127 of p is 1.0 by
    # construction and carries the fc1 bias through row 127.
    h1 = jnp.maximum(
        jnp.dot(p, a_ref[:, 4 * _LANE:4 * _LANE + HIDDEN],
                preferred_element_type=jnp.float32), 0.0)          # (B, 9)

    # ---- LSTM over seq_len = B (batch=1).  The input projection is hoisted out
    # of the serial recurrence and staged into a VMEM scratch.
    wih = b_ref[0:HIDDEN, 0:4 * HIDDEN]                    # (9, 36)
    whh = b_ref[16:16 + HIDDEN, 0:4 * HIDDEN]              # (9, 36)
    bl = b_ref[48:49, 0:4 * HIDDEN]                        # (1, 36)
    gx_ref[...] = jnp.dot(h1, wih, preferred_element_type=jnp.float32) + bl

    # Constants hoisted out of the recurrence (built once, reused every step).
    lane = lax.broadcasted_iota(jnp.int32, (1, 4 * HIDDEN), 1)
    sig_mask = lane < 3 * HIDDEN                           # gate order [i, f, o | g]
    eye9 = (lax.broadcasted_iota(jnp.int32, (HIDDEN, HIDDEN), 0) ==
            lax.broadcasted_iota(jnp.int32, (HIDDEN, HIDDEN), 1)).astype(jnp.float32)

    def step(t, h, cell):
        gx_t = gx_ref[pl.ds(t, 1), :]                       # (1, 36) VMEM row load
        # Recurrent term h @ W_hh WITHOUT the MXU: corner-turn h (1,9)->(9,1)
        # via an eye-masked lane reduce, then lane-broadcast multiply and a
        # sublane reduce.  Pure VPU/XLU work on the serial chain.
        h_col = jnp.sum(jnp.broadcast_to(h, (HIDDEN, HIDDEN)) * eye9,
                        axis=1, keepdims=True)              # (9, 1)
        g = gx_t + jnp.sum(h_col * whh, axis=0, keepdims=True)   # (1, 36)
        # One sigmoid + one tanh over the full 36-lane gate vector, combined
        # with a static lane-index select (2 EUP pushes/step).
        act = jnp.where(sig_mask, jax.nn.sigmoid(g), jnp.tanh(g))
        cell = (act[:, HIDDEN:2 * HIDDEN] * cell
                + act[:, 0:HIDDEN] * act[:, 3 * HIDDEN:4 * HIDDEN])
        h = act[:, 2 * HIDDEN:3 * HIDDEN] * jnp.tanh(cell)
        return h, cell

    h = jnp.zeros((1, HIDDEN), jnp.float32)
    cell = jnp.zeros((1, HIDDEN), jnp.float32)
    if B <= _UNROLL_LIMIT:
        for t in range(B):                                  # small static seq: unroll
            h, cell = step(t, h, cell)
    else:
        h, cell = lax.fori_loop(0, B, lambda t, hc: step(t, *hc), (h, cell),
                                unroll=4)

    # ---- ReLU(h_n) then fc_1 -> (1, num_classes).
    hr = jnp.maximum(h, 0.0)
    out_ref[...] = (jnp.dot(hr, b_ref[32:32 + HIDDEN, 0:nc],
                            preferred_element_type=jnp.float32)
                    + b_ref[56:57, 0:nc])


def prepare_params(params, num_classes=NUM_CLASSES):
    """One-time host-side (numpy) packing of PyTorch-shaped params into 2 slabs.

    Slab A (128, 640):
      cols   0:512  conv-as-matmul blocks shifted by pool offsets, bias row 64,
                    plus slab_a[64, 511] = 1.0 so pooled lane 127 == 1.0.
      cols 512:521  fc1 weight, zero-padded to 128 rows (rows {0,1,3,4} = data,
                    row 127 = fc1 bias; all other rows MUST stay zero).
    Slab B (64, 128):
      rows  0:9   W_ih^T  (gate order [i,f,o,g])
      rows 16:25  W_hh^T
      rows 32:41  fc_1 weight^T
      row  48     combined LSTM bias
      row  56     fc_1 bias
    """
    cw = np.asarray(params["conv_w"], np.float32)[0, 0]     # (3, 3)
    cb = float(np.asarray(params["conv_b"], np.float32)[0])
    fc1_w = np.asarray(params["fc1_w"], np.float32)          # (9, 4)
    fc1_b = np.asarray(params["fc1_b"], np.float32)          # (9,)
    w_ih = np.asarray(params["w_ih"], np.float32)            # (36, 9)
    w_hh = np.asarray(params["w_hh"], np.float32)            # (36, 9)
    b_ih = np.asarray(params["b_ih"], np.float32)
    b_hh = np.asarray(params["b_hh"], np.float32)
    fc2_w = np.asarray(params["fc2_w"], np.float32)          # (C, 9)
    fc2_b = np.asarray(params["fc2_b"], np.float32)          # (C,)

    # Conv2d(1,1,3,stride=2) on 8x8 -> 3x3 map as a (64, 9) Toeplitz matrix.
    k9 = np.zeros((64, 9), np.float32)
    for i in range(3):
        for j in range(3):
            for di in range(3):
                for dj in range(3):
                    k9[(2 * i + di) * 8 + (2 * j + dj), 3 * i + j] = cw[di, dj]

    slab_a = np.zeros((_LANE, 5 * _LANE), np.float32)
    for s, off in enumerate(_POOL_OFFSETS):
        w = 9 - off
        slab_a[0:64, s * _LANE:s * _LANE + w] = k9[:, off:]
        slab_a[64, s * _LANE:s * _LANE + w] = cb             # conv bias row
    slab_a[64, 3 * _LANE + 127] = 1.0                        # pooled lane 127 == 1.0
    slab_a[np.array(_POOL_OFFSETS), 4 * _LANE:4 * _LANE + HIDDEN] = fc1_w.T
    slab_a[127, 4 * _LANE:4 * _LANE + HIDDEN] = fc1_b        # fc1 bias via lane 127

    # LSTM gate permutation: PyTorch [i, f, g, o] -> kernel [i, f, o, g].
    perm = np.concatenate([np.arange(0, 2 * HIDDEN),
                           np.arange(3 * HIDDEN, 4 * HIDDEN),
                           np.arange(2 * HIDDEN, 3 * HIDDEN)])
    slab_b = np.zeros((64, _LANE), np.float32)
    slab_b[0:HIDDEN, 0:4 * HIDDEN] = w_ih[perm, :].T
    slab_b[16:16 + HIDDEN, 0:4 * HIDDEN] = w_hh[perm, :].T
    slab_b[32:32 + HIDDEN, 0:num_classes] = fc2_w.T
    slab_b[48, 0:4 * HIDDEN] = (b_ih + b_hh)[perm]
    slab_b[56, 0:num_classes] = fc2_b

    return {"slab_a": jnp.asarray(slab_a),
            "slab_b": jnp.asarray(slab_b),
            "num_classes": num_classes}


def cnn_lstm_forward(x, prepared):
    B = x.shape[0]
    nc = prepared["num_classes"]
    x_flat = x[:, 0, :, :].reshape(B, 64).astype(jnp.float32)        # (B, 64)
    # Pad to 128 lanes with a constant-1 lane at 64 (conv-bias carrier).
    x_pad = jnp.concatenate(
        [x_flat, jnp.ones((B, 1), jnp.float32),
         jnp.zeros((B, _LANE - 65), jnp.float32)], axis=1)           # (B, 128)

    vmem = pl.BlockSpec(memory_space=pltpu.MemorySpace.VMEM)
    return pl.pallas_call(
        cnn_lstm_kernel,
        out_shape=jax.ShapeDtypeStruct((1, nc), jnp.float32),
        in_specs=[vmem, vmem, vmem],
        out_specs=vmem,
        scratch_shapes=[pltpu.VMEM((B, 4 * HIDDEN), jnp.float32)],   # staged gx
    )(x_pad, prepared["slab_a"], prepared["slab_b"])


def reference_forward(x, params):
    """Pure-JAX reference mirroring the PyTorch forward."""
    conv = lax.conv_general_dilated(
        x, params["conv_w"], window_strides=(2, 2), padding="VALID",
        dimension_numbers=("NCHW", "OIHW", "NCHW"))
    conv = jnp.maximum(conv + params["conv_b"].reshape(1, -1, 1, 1), 0.0)
    pooled = lax.reduce_window(conv, -jnp.inf, lax.max,
                               (1, 1, 2, 2), (1, 1, 1, 1), "VALID")
    feat = pooled.reshape(x.shape[0], -1)                            # (B, 4)
    h1 = jnp.maximum(feat @ params["fc1_w"].T + params["fc1_b"], 0.0)
    h = jnp.zeros((1, HIDDEN), jnp.float32)
    c = jnp.zeros((1, HIDDEN), jnp.float32)
    for t in range(x.shape[0]):
        xt = h1[t:t + 1]
        g = (xt @ params["w_ih"].T + params["b_ih"]
             + h @ params["w_hh"].T + params["b_hh"])
        i_g = jax.nn.sigmoid(g[:, 0:HIDDEN])
        f_g = jax.nn.sigmoid(g[:, HIDDEN:2 * HIDDEN])
        g_g = jnp.tanh(g[:, 2 * HIDDEN:3 * HIDDEN])
        o_g = jax.nn.sigmoid(g[:, 3 * HIDDEN:4 * HIDDEN])
        c = f_g * c + i_g * g_g
        h = o_g * jnp.tanh(c)
    hr = jnp.maximum(h, 0.0)
    return hr @ params["fc2_w"].T + params["fc2_b"]


def init_params(key, num_classes=NUM_CLASSES):
    ks = jax.random.split(key, 10)
    s = 0.1
    return {
        # PyTorch-shaped parameters (deterministic synthetic init).
        "conv_w": s * jax.random.normal(ks[0], (1, 1, 3, 3), jnp.float32),
        "conv_b": s * jax.random.normal(ks[1], (1,), jnp.float32),
        "fc1_w": s * jax.random.normal(ks[2], (9, 4), jnp.float32),
        "fc1_b": s * jax.random.normal(ks[3], (9,), jnp.float32),
        "w_ih": s * jax.random.normal(ks[4], (4 * HIDDEN, 9), jnp.float32),
        "w_hh": s * jax.random.normal(ks[5], (4 * HIDDEN, HIDDEN), jnp.float32),
        "b_ih": s * jax.random.normal(ks[6], (4 * HIDDEN,), jnp.float32),
        "b_hh": s * jax.random.normal(ks[7], (4 * HIDDEN,), jnp.float32),
        "fc2_w": s * jax.random.normal(ks[8], (num_classes, HIDDEN), jnp.float32),
        "fc2_b": s * jax.random.normal(ks[9], (num_classes,), jnp.float32),
    }


if __name__ == "__main__":
    key = jax.random.PRNGKey(0)
    kx, kp, kx2 = jax.random.split(key, 3)
    params = init_params(kp)
    prepared = prepare_params(params)           # one-time host-side weight packing

    # Input consistent with the forward: conv(3,s2) -> 3x3, pool(2,s1) -> 2x2,
    # flatten -> 4 features => spatial 8x8, channels = 1.
    x = jax.random.normal(kx, (2, 1, 8, 8), jnp.float32)
    out = jax.block_until_ready(cnn_lstm_forward(x, prepared))
    ref = reference_forward(x, params)
    assert out.shape == (1, NUM_CLASSES), out.shape
    assert jnp.allclose(out, ref, atol=1e-4, rtol=1e-4), (out, ref)

    # Long-sequence case exercising the fori_loop recurrence path (B > _UNROLL_LIMIT).
    x_long = jax.random.normal(kx2, (72, 1, 8, 8), jnp.float32)
    out_long = jax.block_until_ready(cnn_lstm_forward(x_long, prepared))
    ref_long = reference_forward(x_long, params)
    assert jnp.allclose(out_long, ref_long, atol=5e-4, rtol=5e-4), (out_long, ref_long)

    print("KERNEL_OK")
</pallas_src>

<mosaic_0001>
module attributes {stable_mosaic.version = 11 : i64} {
  func.func @cnn_lstm_kernel(%arg0: memref<2x128xf32, #tpu.memory_space<vmem>>, %arg1: memref<128x640xf32, #tpu.memory_space<vmem>>, %arg2: memref<64x128xf32, #tpu.memory_space<vmem>>, %arg3: memref<1x10xf32, #tpu.memory_space<vmem>>, %arg4: memref<2x36xf32, #tpu.memory_space<vmem>>) attributes {dimension_semantics = [], scalar_prefetch = 0 : i64, scratch_operands = 1 : i64, tpu.core_type = #tpu.core_type<tc>} {
    %c0 = arith.constant 0 : index
    %c0_0 = arith.constant 0 : index
    %0 = vector.load %arg0[%c0, %c0_0] : memref<2x128xf32, #tpu.memory_space<vmem>>, vector<2x128xf32>
    %c0_1 = arith.constant 0 : index
    %c0_2 = arith.constant 0 : index
    %1 = vector.load %arg1[%c0_1, %c0_2] : memref<128x640xf32, #tpu.memory_space<vmem>>, vector<128x512xf32>
    %cst = arith.constant dense<0.000000e+00> : vector<2x512xf32>
    %2 = tpu.matmul %0, %1, %cst {dimension_numbers = #tpu.dot_dimension_numbers<[1], [0], [0], [1], [0, 0, 1, 1], [], []>} : vector<2x128xf32>, vector<128x512xf32>, vector<2x512xf32> -> vector<2x512xf32>
    %cst_3 = arith.constant 0.000000e+00 : f32
    %3 = vector.broadcast %cst_3 : f32 to vector<2x512xf32>
    %4 = arith.maximumf %2, %3 : vector<2x512xf32>
    %5 = vector.extract_strided_slice %4 {offsets = [0, 0], sizes = [2, 128], strides = [1, 1]} : vector<2x512xf32> to vector<2x128xf32>
    %6 = vector.extract_strided_slice %4 {offsets = [0, 128], sizes = [2, 128], strides = [1, 1]} : vector<2x512xf32> to vector<2x128xf32>
    %7 = arith.maximumf %5, %6 : vector<2x128xf32>
    %8 = vector.extract_strided_slice %4 {offsets = [0, 256], sizes = [2, 128], strides = [1, 1]} : vector<2x512xf32> to vector<2x128xf32>
    %9 = vector.extract_strided_slice %4 {offsets = [0, 384], sizes = [2, 128], strides = [1, 1]} : vector<2x512xf32> to vector<2x128xf32>
    %10 = arith.maximumf %8, %9 : vector<2x128xf32>
    %11 = arith.maximumf %7, %10 : vector<2x128xf32>
    %c0_4 = arith.constant 0 : index
    %c512 = arith.constant 512 : index
    %12 = vector.load %arg1[%c0_4, %c512] : memref<128x640xf32, #tpu.memory_space<vmem>>, vector<128x9xf32>
    %cst_5 = arith.constant dense<0.000000e+00> : vector<2x9xf32>
    %13 = tpu.matmul %11, %12, %cst_5 {dimension_numbers = #tpu.dot_dimension_numbers<[1], [0], [0], [1], [0, 0, 1, 1], [], []>} : vector<2x128xf32>, vector<128x9xf32>, vector<2x9xf32> -> vector<2x9xf32>
    %cst_6 = arith.constant 0.000000e+00 : f32
    %14 = vector.broadcast %cst_6 : f32 to vector<2x9xf32>
    %15 = arith.maximumf %13, %14 : vector<2x9xf32>
    %c0_7 = arith.constant 0 : index
    %c0_8 = arith.constant 0 : index
    %16 = vector.load %arg2[%c0_7, %c0_8] : memref<64x128xf32, #tpu.memory_space<vmem>>, vector<9x36xf32>
    %c16 = arith.constant 16 : index
    %c0_9 = arith.constant 0 : index
    %17 = vector.load %arg2[%c16, %c0_9] : memref<64x128xf32, #tpu.memory_space<vmem>>, vector<9x36xf32>
    %c48 = arith.constant 48 : index
    %c0_10 = arith.constant 0 : index
    %18 = vector.load %arg2[%c48, %c0_10] : memref<64x128xf32, #tpu.memory_space<vmem>>, vector<1x36xf32>
    %cst_11 = arith.constant dense<0.000000e+00> : vector<2x36xf32>
    %19 = tpu.matmul %15, %16, %cst_11 {dimension_numbers = #tpu.dot_dimension_numbers<[1], [0], [0], [1], [0, 0, 1, 1], [], []>} : vector<2x9xf32>, vector<9x36xf32>, vector<2x36xf32> -> vector<2x36xf32>
    %20 = vector.broadcast %18 : vector<1x36xf32> to vector<2x36xf32>
    %21 = arith.addf %19, %20 : vector<2x36xf32>
    %c0_12 = arith.constant 0 : index
    %c0_13 = arith.constant 0 : index
    %22 = vector.load %arg4[%c0_12, %c0_13] : memref<2x36xf32, #tpu.memory_space<vmem>>, vector<2x36xf32>
    tpu.vector_store %arg4[%c0_12, %c0_13], %21 {strides = array<i32>} : memref<2x36xf32, #tpu.memory_space<vmem>>, vector<2x36xf32>,
    %23 = tpu.iota {dimensions = array<i32: 1>} : vector<1x36xi32>
    %c27_i32 = arith.constant 27 : i32
    %24 = vector.broadcast %c27_i32 : i32 to vector<1x36xi32>
    %25 = arith.cmpi slt, %23, %24 : vector<1x36xi32>
    %26 = tpu.iota {dimensions = array<i32: 0>} : vector<9x9xi32>
    %27 = tpu.iota {dimensions = array<i32: 1>} : vector<9x9xi32>
    %28 = arith.cmpi eq, %26, %27 : vector<9x9xi32>
    %29 = arith.extui %28 : vector<9x9xi1> to vector<9x9xi32>
    %30 = arith.sitofp %29 : vector<9x9xi32> to vector<9x9xf32>
    %cst_14 = arith.constant 0.000000e+00 : f32
    %31 = vector.broadcast %cst_14 : f32 to vector<1x9xf32>
    %cst_15 = arith.constant 0.000000e+00 : f32
    %32 = vector.broadcast %cst_15 : f32 to vector<1x9xf32>
    %c0_16 = arith.constant 0 : index
    %c0_17 = arith.constant 0 : index
    %33 = vector.load %arg4[%c0_16, %c0_17] : memref<2x36xf32, #tpu.memory_space<vmem>>, vector<1x36xf32>
    %34 = vector.shape_cast %31 : vector<1x9xf32> to vector<1x9xf32>
    %35 = vector.broadcast %34 : vector<1x9xf32> to vector<9x9xf32>
    %36 = arith.mulf %35, %30 : vector<9x9xf32>
    %cst_18 = arith.constant dense<0.000000e+00> : vector<9xf32>
    %37 = vector.multi_reduction <add>, %36, %cst_18 [1] : vector<9x9xf32> to vector<9xf32>
    %38 = vector.shape_cast %37 : vector<9xf32> to vector<9x1xf32>
    %39 = vector.broadcast %38 : vector<9x1xf32> to vector<9x36xf32>
    %40 = arith.mulf %39, %17 : vector<9x36xf32>
    %cst_19 = arith.constant dense<0.000000e+00> : vector<36xf32>
    %41 = vector.multi_reduction <add>, %40, %cst_19 [0] : vector<9x36xf32> to vector<36xf32>
    %42 = vector.shape_cast %41 : vector<36xf32> to vector<1x36xf32>
    %43 = arith.addf %33, %42 : vector<1x36xf32>
    %44 = arith.negf %43 : vector<1x36xf32>
    %45 = math.exp %44 : vector<1x36xf32>
    %cst_20 = arith.constant 1.000000e+00 : f32
    %46 = vector.broadcast %cst_20 : f32 to vector<1x36xf32>
    %47 = arith.addf %46, %45 : vector<1x36xf32>
    %48 = arith.divf %46, %47 : vector<1x36xf32>
    %49 = math.tanh %43 : vector<1x36xf32>
    %50 = arith.select %25, %48, %49 : vector<1x36xi1>, vector<1x36xf32>
    %51 = vector.extract_strided_slice %50 {offsets = [0, 9], sizes = [1, 9], strides = [1, 1]} : vector<1x36xf32> to vector<1x9xf32>
    %52 = arith.mulf %51, %32 : vector<1x9xf32>
    %53 = vector.extract_strided_slice %50 {offsets = [0, 0], sizes = [1, 9], strides = [1, 1]} : vector<1x36xf32> to vector<1x9xf32>
    %54 = vector.extract_strided_slice %50 {offsets = [0, 27], sizes = [1, 9], strides = [1, 1]} : vector<1x36xf32> to vector<1x9xf32>
    %55 = arith.mulf %53, %54 : vector<1x9xf32>
    %56 = arith.addf %52, %55 : vector<1x9xf32>
    %57 = vector.extract_strided_slice %50 {offsets = [0, 18], sizes = [1, 9], strides = [1, 1]} : vector<1x36xf32> to vector<1x9xf32>
    %58 = math.tanh %56 : vector<1x9xf32>
    %59 = arith.mulf %57, %58 : vector<1x9xf32>
    %c1 = arith.constant 1 : index
    %c0_21 = arith.constant 0 : index
    %60 = vector.load %arg4[%c1, %c0_21] : memref<2x36xf32, #tpu.memory_space<vmem>>, vector<1x36xf32>
    %61 = vector.shape_cast %59 : vector<1x9xf32> to vector<1x9xf32>
    %62 = vector.broadcast %61 : vector<1x9xf32> to vector<9x9xf32>
    %63 = arith.mulf %62, %30 : vector<9x9xf32>
    %cst_22 = arith.constant dense<0.000000e+00> : vector<9xf32>
    %64 = vector.multi_reduction <add>, %63, %cst_22 [1] : vector<9x9xf32> to vector<9xf32>
    %65 = vector.shape_cast %64 : vector<9xf32> to vector<9x1xf32>
    %66 = vector.broadcast %65 : vector<9x1xf32> to vector<9x36xf32>
    %67 = arith.mulf %66, %17 : vector<9x36xf32>
    %cst_23 = arith.constant dense<0.000000e+00> : vector<36xf32>
    %68 = vector.multi_reduction <add>, %67, %cst_23 [0] : vector<9x36xf32> to vector<36xf32>
    %69 = vector.shape_cast %68 : vector<36xf32> to vector<1x36xf32>
    %70 = arith.addf %60, %69 : vector<1x36xf32>
    %71 = arith.negf %70 : vector<1x36xf32>
    %72 = math.exp %71 : vector<1x36xf32>
    %cst_24 = arith.constant 1.000000e+00 : f32
    %73 = vector.broadcast %cst_24 : f32 to vector<1x36xf32>
    %74 = arith.addf %73, %72 : vector<1x36xf32>
    %75 = arith.divf %73, %74 : vector<1x36xf32>
    %76 = math.tanh %70 : vector<1x36xf32>
    %77 = arith.select %25, %75, %76 : vector<1x36xi1>, vector<1x36xf32>
    %78 = vector.extract_strided_slice %77 {offsets = [0, 9], sizes = [1, 9], strides = [1, 1]} : vector<1x36xf32> to vector<1x9xf32>
    %79 = arith.mulf %78, %56 : vector<1x9xf32>
    %80 = vector.extract_strided_slice %77 {offsets = [0, 0], sizes = [1, 9], strides = [1, 1]} : vector<1x36xf32> to vector<1x9xf32>
    %81 = vector.extract_strided_slice %77 {offsets = [0, 27], sizes = [1, 9], strides = [1, 1]} : vector<1x36xf32> to vector<1x9xf32>
    %82 = arith.mulf %80, %81 : vector<1x9xf32>
    %83 = arith.addf %79, %82 : vector<1x9xf32>
    %84 = vector.extract_strided_slice %77 {offsets = [0, 18], sizes = [1, 9], strides = [1, 1]} : vector<1x36xf32> to vector<1x9xf32>
    %85 = math.tanh %83 : vector<1x9xf32>
    %86 = arith.mulf %84, %85 : vector<1x9xf32>
    %cst_25 = arith.constant 0.000000e+00 : f32
    %87 = vector.broadcast %cst_25 : f32 to vector<1x9xf32>
    %88 = arith.maximumf %86, %87 : vector<1x9xf32>
    %c32 = arith.constant 32 : index
    %c0_26 = arith.constant 0 : index
    %89 = vector.load %arg2[%c32, %c0_26] : memref<64x128xf32, #tpu.memory_space<vmem>>, vector<9x10xf32>
    %cst_27 = arith.constant dense<0.000000e+00> : vector<1x10xf32>
    %90 = tpu.matmul %88, %89, %cst_27 {dimension_numbers = #tpu.dot_dimension_numbers<[1], [0], [0], [1], [0, 0, 1, 1], [], []>} : vector<1x9xf32>, vector<9x10xf32>, vector<1x10xf32> -> vector<1x10xf32>
    %c56 = arith.constant 56 : index
    %c0_28 = arith.constant 0 : index
    %91 = vector.load %arg2[%c56, %c0_28] : memref<64x128xf32, #tpu.memory_space<vmem>>, vector<1x10xf32>
    %92 = arith.addf %90, %91 : vector<1x10xf32>
    %c0_29 = arith.constant 0 : index
    %c0_30 = arith.constant 0 : index
    %93 = vector.load %arg3[%c0_29, %c0_30] : memref<1x10xf32, #tpu.memory_space<vmem>>, vector<1x10xf32>
    tpu.vector_store %arg3[%c0_29, %c0_30], %92 {strides = array<i32>} : memref<1x10xf32, #tpu.memory_space<vmem>>, vector<1x10xf32>,
    return
  }
}

</mosaic_0001>

<llo_original>
// kernel: tpu_custom_call.1
$region0: #{tpu_custom_call.1}
  #allocation0 [shape = 'u32[]', space=smem, size = 0x4, offset = 0x4, fixed_abs, tag = 'smem constant byte address 0x4 - core index']
  #allocation1 [shape = 'u32[72,128]{1,0:T(1,128)}', space=vmem, size = 0x9000, scoped, tag = 'internal scratch']
  #allocation2 [shape = 'f32[2,36]{1,0:T(2,128)}', space=vmem, size = 0x400, scoped, tag = 'scratch operand']
  %s0 = inlined_call_operand.hbm [shape: f32[2,128], index: 0, kind: input, shape index: {}]
  %s1 = inlined_call_operand.hbm [shape: f32[128,640], index: 1, kind: input, shape index: {}]
  %s2 = inlined_call_operand.hbm [shape: f32[64,128], index: 2, kind: input, shape index: {}]
  %s3 = inlined_call_operand.hbm [shape: f32[1,10], index: 3, kind: output, shape index: {}]
  %s4 = sld [smem:[#allocation0]]
  $region34: #{tpu_custom_call.1} parent=0
    _
  %s6 = ssub.s32 1, %s4
  %s7 = scalar_select 0, %s6, %s4
  $region1: #{tpu_custom_call.1} parent=0
    #allocation3 [shape = 'u8[1024]{0}', space=vmem, size = 0x400, scoped, tag = 'input window, operand 0, single buffered']
    #allocation4 [shape = 's32[1]{0}', space=sflag, size = 0x4, scoped, tag = 'scoped memory for tpu_custom_call.1']
    #allocation5 [shape = 's32[1]{0}', space=sflag, size = 0x4, scoped, tag = 'scoped memory for tpu_custom_call.1']
    #allocation6 [shape = 'u8[327680]{0}', space=vmem, size = 0x50000, scoped, tag = 'input window, operand 1, single buffered']
    #allocation7 [shape = 's32[1]{0}', space=sflag, size = 0x4, scoped, tag = 'scoped memory for tpu_custom_call.1']
    #allocation8 [shape = 'u8[32768]{0}', space=vmem, size = 0x8000, scoped, tag = 'input window, operand 2, single buffered']
    #allocation9 [shape = 'u8[512]{0}', space=vmem, size = 0x400, scoped, tag = 'output window, operand 0, single buffered']
    %8 = vsyncpa [#allocation4], 0
    %9 = vsyncpa [#allocation7], 0
    %10 = vsyncpa [#allocation5], 0
    // Predicated region
    $region2: #{tpu_custom_call.1} parent=1 // pred_check
      _
    $region3: #{tpu_custom_call.1} parent=1 // pred_check_branch
      %12 = sbr.rel (0) target = $region5
    $region4: #{tpu_custom_call.1} parent=1 // pred_region
      %14 = vsyncadd [#allocation4], 0
      %s16 = sshll.u32 %s0, 4
      %s17 = int_to_ptr.hbm [resolvable:$true] %s16
      %s18 = sshll.u32 [#allocation3], 4
      %s19 = int_to_ptr.vmem [resolvable:$true] %s18
      %21 = dma.hbm_to_vmem [thread:$0]  %s17, 32, %s19, [#allocation4]
    $region5: #{tpu_custom_call.1} parent=1 // pred_fallthru
      _
    // Predicated region
    $region6: #{tpu_custom_call.1} parent=1 // pred_check
      _
    $region7: #{tpu_custom_call.1} parent=1 // pred_check_branch
      %23 = sbr.rel (0) target = $region9
    $region8: #{tpu_custom_call.1} parent=1 // pred_region
      %25 = vsyncadd [#allocation7], 0
      %s26 = sshll.u32 %s1, 4
      %s27 = int_to_ptr.hbm [resolvable:$true] %s26
      %s28 = sshll.u32 [#allocation6], 4
      %s29 = int_to_ptr.vmem [resolvable:$true] %s28
      %34 = dma.hbm_to_vmem [thread:$0]  %s27, 10240, %s29, [#allocation7], 640, 640, 40
    $region9: #{tpu_custom_call.1} parent=1 // pred_fallthru
      _
    // Predicated region
    $region10: #{tpu_custom_call.1} parent=1 // pred_check
      _
    $region11: #{tpu_custom_call.1} parent=1 // pred_check_branch
      %36 = sbr.rel (0) target = $region13
    $region12: #{tpu_custom_call.1} parent=1 // pred_region
      %38 = vsyncadd [#allocation7], 0
      %s39 = sshll.u32 %s2, 4
      %s40 = int_to_ptr.hbm [resolvable:$true] %s39
      %s41 = sshll.u32 [#allocation8], 4
      %s42 = int_to_ptr.vmem [resolvable:$true] %s41
      %47 = dma.hbm_to_vmem [thread:$0]  %s40, 1024, %s42, [#allocation7], 128, 128, 8
    $region13: #{tpu_custom_call.1} parent=1 // pred_fallthru
      _
    // Predicated region
    $region14: #{tpu_custom_call.1} parent=1 // pred_check
      _
    $region15: #{tpu_custom_call.1} parent=1 // pred_check_branch
      %49 = sbr.rel (0) target = $region17
    $region16: #{tpu_custom_call.1} parent=1 // pred_region
      %51 = dma.done [#allocation4], 32
    $region17: #{tpu_custom_call.1} parent=1 // pred_fallthru
      _
    // Predicated region
    $region18: #{tpu_custom_call.1} parent=1 // pred_check
      _
    $region19: #{tpu_custom_call.1} parent=1 // pred_check_branch
      %53 = sbr.rel (0) target = $region21
    $region20: #{tpu_custom_call.1} parent=1 // pred_region
      %55 = dma.done [#allocation7], 10240
    $region21: #{tpu_custom_call.1} parent=1 // pred_fallthru
      _
    // Predicated region
    $region22: #{tpu_custom_call.1} parent=1 // pred_check
      _
    $region23: #{tpu_custom_call.1} parent=1 // pred_check_branch
      %57 = sbr.rel (0) target = $region25
    $region24: #{tpu_custom_call.1} parent=1 // pred_region
      %59 = dma.done [#allocation7], 1024
    $region25: #{tpu_custom_call.1} parent=1 // pred_fallthru
      _
    %v60 = vld [vmem:[#allocation3] sm:$0x3]
    %v61 = vld [vmem:[#allocation6] sm:$0xff]
    %v62 = vld [vmem:[#allocation6 + $0x8] sm:$0xff]
    %v63 = vld [vmem:[#allocation6 + $0x10] sm:$0xff]
    %v64 = vld [vmem:[#allocation6 + $0x18] sm:$0xff]
    %v65 = vld [vmem:[#allocation6 + $0x28] sm:$0xff]
    %v66 = vld [vmem:[#allocation6 + $0x30] sm:$0xff]
    %v67 = vld [vmem:[#allocation6 + $0x38] sm:$0xff]
    %v68 = vld [vmem:[#allocation6 + $0x40] sm:$0xff]
    %v69 = vld [vmem:[#allocation6 + $0x50] sm:$0xff]
    %v70 = vld [vmem:[#allocation6 + $0x58] sm:$0xff]
    %v71 = vld [vmem:[#allocation6 + $0x60] sm:$0xff]
    %v72 = vld [vmem:[#allocation6 + $0x68] sm:$0xff]
    %v73 = vld [vmem:[#allocation6 + $0x78] sm:$0xff]
    %v74 = vld [vmem:[#allocation6 + $0x80] sm:$0xff]
    %v75 = vld [vmem:[#allocation6 + $0x88] sm:$0xff]
    %v76 = vld [vmem:[#allocation6 + $0x90] sm:$0xff]
    %v77 = vld [vmem:[#allocation6 + $0xa0] sm:$0xff]
    %v78 = vld [vmem:[#allocation6 + $0xa8] sm:$0xff]
    %v79 = vld [vmem:[#allocation6 + $0xb0] sm:$0xff]
    %v80 = vld [vmem:[#allocation6 + $0xb8] sm:$0xff]
    %v81 = vld [vmem:[#allocation6 + $0xc8] sm:$0xff]
    %v82 = vld [vmem:[#allocation6 + $0xd0] sm:$0xff]
    %v83 = vld [vmem:[#allocation6 + $0xd8] sm:$0xff]
    %v84 = vld [vmem:[#allocation6 + $0xe0] sm:$0xff]
    %v85 = vld [vmem:[#allocation6 + $0xf0] sm:$0xff]
    %v86 = vld [vmem:[#allocation6 + $0xf8] sm:$0xff]
    %v87 = vld [vmem:[#allocation6 + $0x100] sm:$0xff]
    %v88 = vld [vmem:[#allocation6 + $0x108] sm:$0xff]
    %v89 = vld [vmem:[#allocation6 + $0x118] sm:$0xff]
    %v90 = vld [vmem:[#allocation6 + $0x120] sm:$0xff]
    %v91 = vld [vmem:[#allocation6 + $0x128] sm:$0xff]
    %v92 = vld [vmem:[#allocation6 + $0x130] sm:$0xff]
    %v93 = vld [vmem:[#allocation6 + $0x140] sm:$0xff]
    %v94 = vld [vmem:[#allocation6 + $0x148] sm:$0xff]
    %v95 = vld [vmem:[#allocation6 + $0x150] sm:$0xff]
    %v96 = vld [vmem:[#allocation6 + $0x158] sm:$0xff]
    %v97 = vld [vmem:[#allocation6 + $0x168] sm:$0xff]
    %v98 = vld [vmem:[#allocation6 + $0x170] sm:$0xff]
    %v99 = vld [vmem:[#allocation6 + $0x178] sm:$0xff]
    %v100 = vld [vmem:[#allocation6 + $0x180] sm:$0xff]
    %v101 = vld [vmem:[#allocation6 + $0x190] sm:$0xff]
    %v102 = vld [vmem:[#allocation6 + $0x198] sm:$0xff]
    %v103 = vld [vmem:[#allocation6 + $0x1a0] sm:$0xff]
    %v104 = vld [vmem:[#allocation6 + $0x1a8] sm:$0xff]
    %v105 = vld [vmem:[#allocation6 + $0x1b8] sm:$0xff]
    %v106 = vld [vmem:[#allocation6 + $0x1c0] sm:$0xff]
    %v107 = vld [vmem:[#allocation6 + $0x1c8] sm:$0xff]
    %v108 = vld [vmem:[#allocation6 + $0x1d0] sm:$0xff]
    %v109 = vld [vmem:[#allocation6 + $0x1e0] sm:$0xff]
    %v110 = vld [vmem:[#allocation6 + $0x1e8] sm:$0xff]
    %v111 = vld [vmem:[#allocation6 + $0x1f0] sm:$0xff]
    %v112 = vld [vmem:[#allocation6 + $0x1f8] sm:$0xff]
    %v113 = vld [vmem:[#allocation6 + $0x208] sm:$0xff]
    %v114 = vld [vmem:[#allocation6 + $0x210] sm:$0xff]
    %v115 = vld [vmem:[#allocation6 + $0x218] sm:$0xff]
    %v116 = vld [vmem:[#allocation6 + $0x220] sm:$0xff]
    %v117 = vld [vmem:[#allocation6 + $0x230] sm:$0xff]
    %v118 = vld [vmem:[#allocation6 + $0x238] sm:$0xff]
    %v119 = vld [vmem:[#allocation6 + $0x240] sm:$0xff]
    %v120 = vld [vmem:[#allocation6 + $0x248] sm:$0xff]
    %v121 = vld [vmem:[#allocation6 + $0x258] sm:$0xff]
    %v122 = vld [vmem:[#allocation6 + $0x260] sm:$0xff]
    %v123 = vld [vmem:[#allocation6 + $0x268] sm:$0xff]
    %v124 = vld [vmem:[#allocation6 + $0x270] sm:$0xff]
    %125 = vmatpush.msra.mxu0 %v121
    %126 = vmatpush.msra.mxu0 %v117
    %127 = vmatpush.msra.mxu0 %v113
    %128 = vmatpush.msra.mxu0 %v109
    %129 = vmatpush.msra.mxu0 %v105
    %130 = vmatpush.msra.mxu0 %v101
    %131 = vmatpush.msra.mxu0 %v97
    %132 = vmatpush.msra.mxu0 %v93
    %133 = vmatpush.msra.mxu0 %v89
    %134 = vmatpush.msra.mxu0 %v85
    %135 = vmatpush.msra.mxu0 %v81
    %136 = vmatpush.msra.mxu0 %v77
    %137 = vmatpush.msra.mxu0 %v73
    %138 = vmatpush.msra.mxu0 %v69
    %139 = vmatpush.msra.mxu0 %v65
    %140 = vmatpush.msra.mxu0 %v61
    %141 = vmatmul.f32.gmra.mxu0 %v60
    %v142 = vpop.f32.mrf.mxu0
    %v143 = vadd.f32 0.0, %v142
    %144 = vdwg.mxu0
    %145 = vmatpush.msra.mxu0 %v122
    %146 = vmatpush.msra.mxu0 %v118
    %147 = vmatpush.msra.mxu0 %v114
    %148 = vmatpush.msra.mxu0 %v110
    %149 = vmatpush.msra.mxu0 %v106
    %150 = vmatpush.msra.mxu0 %v102
    %151 = vmatpush.msra.mxu0 %v98
    %152 = vmatpush.msra.mxu0 %v94
    %153 = vmatpush.msra.mxu0 %v90
    %154 = vmatpush.msra.mxu0 %v86
    %155 = vmatpush.msra.mxu0 %v82
    %156 = vmatpush.msra.mxu0 %v78
    %157 = vmatpush.msra.mxu0 %v74
    %158 = vmatpush.msra.mxu0 %v70
    %159 = vmatpush.msra.mxu0 %v66
    %160 = vmatpush.msra.mxu0 %v62
    %161 = vmatmul.f32.gmra.mxu0 %v60
    %v162 = vpop.f32.mrf.mxu0
    %v163 = vadd.f32 0.0, %v162
    %164 = vdwg.mxu0
    %165 = vmatpush.msra.mxu0 %v123
    %166 = vmatpush.msra.mxu0 %v119
    %167 = vmatpush.msra.mxu0 %v115
    %168 = vmatpush.msra.mxu0 %v111
    %169 = vmatpush.msra.mxu0 %v107
    %170 = vmatpush.msra.mxu0 %v103
    %171 = vmatpush.msra.mxu0 %v99
    %172 = vmatpush.msra.mxu0 %v95
    %173 = vmatpush.msra.mxu0 %v91
    %174 = vmatpush.msra.mxu0 %v87
    %175 = vmatpush.msra.mxu0 %v83
    %176 = vmatpush.msra.mxu0 %v79
    %177 = vmatpush.msra.mxu0 %v75
    %178 = vmatpush.msra.mxu0 %v71
    %179 = vmatpush.msra.mxu0 %v67
    %180 = vmatpush.msra.mxu0 %v63
    %181 = vmatmul.f32.gmra.mxu0 %v60
    %v182 = vpop.f32.mrf.mxu0
    %v183 = vadd.f32 0.0, %v182
    %184 = vdwg.mxu0
    %185 = vmatpush.msra.mxu0 %v124
    %186 = vmatpush.msra.mxu0 %v120
    %187 = vmatpush.msra.mxu0 %v116
    %188 = vmatpush.msra.mxu0 %v112
    %189 = vmatpush.msra.mxu0 %v108
    %190 = vmatpush.msra.mxu0 %v104
    %191 = vmatpush.msra.mxu0 %v100
    %192 = vmatpush.msra.mxu0 %v96
    %193 = vmatpush.msra.mxu0 %v92
    %194 = vmatpush.msra.mxu0 %v88
    %195 = vmatpush.msra.mxu0 %v84
    %196 = vmatpush.msra.mxu0 %v80
    %197 = vmatpush.msra.mxu0 %v76
    %198 = vmatpush.msra.mxu0 %v72
    %199 = vmatpush.msra.mxu0 %v68
    %200 = vmatpush.msra.mxu0 %v64
    %201 = vmatmul.f32.gmra.mxu0 %v60
    %v202 = vpop.f32.mrf.mxu0
    %v203 = vadd.f32 0.0, %v202
    %204 = vdwg.mxu0
    %v205 = vmax.f32 %v143, 0.0
    %v206 = vmax.f32 %v163, 0.0
    %v207 = vmax.f32 %v183, 0.0
    %v208 = vmax.f32 %v203, 0.0
    %v209 = vmax.f32 %v205, %v206
    %v210 = vmax.f32 %v207, %v208
    %v211 = vmax.f32 %v209, %v210
    %v212 = vld [vmem:[#allocation6 + $0x20] sm:$0xff]
    %v213 = vld [vmem:[#allocation6 + $0x48] sm:$0xff]
    %v214 = vld [vmem:[#allocation6 + $0x70] sm:$0xff]
    %v215 = vld [vmem:[#allocation6 + $0x98] sm:$0xff]
    %v216 = vld [vmem:[#allocation6 + $0xc0] sm:$0xff]
    %v217 = vld [vmem:[#allocation6 + $0xe8] sm:$0xff]
    %v218 = vld [vmem:[#allocation6 + $0x110] sm:$0xff]
    %v219 = vld [vmem:[#allocation6 + $0x138] sm:$0xff]
    %v220 = vld [vmem:[#allocation6 + $0x160] sm:$0xff]
    %v221 = vld [vmem:[#allocation6 + $0x188] sm:$0xff]
    %v222 = vld [vmem:[#allocation6 + $0x1b0] sm:$0xff]
    %v223 = vld [vmem:[#allocation6 + $0x1d8] sm:$0xff]
    %v224 = vld [vmem:[#allocation6 + $0x200] sm:$0xff]
    %v225 = vld [vmem:[#allocation6 + $0x228] sm:$0xff]
    %v226 = vld [vmem:[#allocation6 + $0x250] sm:$0xff]
    %v227 = vld [vmem:[#allocation6 + $0x278] sm:$0xff]
    %228 = vmatpush.msra.mxu0 %v227
    %229 = vmatpush.msra.mxu0 %v226
    %230 = vmatpush.msra.mxu0 %v225
    %231 = vmatpush.msra.mxu0 %v224
    %232 = vmatpush.msra.mxu0 %v223
    %233 = vmatpush.msra.mxu0 %v222
    %234 = vmatpush.msra.mxu0 %v221
    %235 = vmatpush.msra.mxu0 %v220
    %236 = vmatpush.msra.mxu0 %v219
    %237 = vmatpush.msra.mxu0 %v218
    %238 = vmatpush.msra.mxu0 %v217
    %239 = vmatpush.msra.mxu0 %v216
    %240 = vmatpush.msra.mxu0 %v215
    %241 = vmatpush.msra.mxu0 %v214
    %242 = vmatpush.msra.mxu0 %v213
    %243 = vmatpush.msra.mxu0 %v212
    %244 = vmatmul.f32.gmra.mxu0 %v211
    %v245 = vpop.f32.mrf.mxu0
    %v246 = vadd.f32 0.0, %v245
    %247 = vdwg.mxu0
    %v248 = vmax.f32 %v246, 0.0
    %v249 = vld [vmem:[#allocation8] sm:$0xff]
    %v250 = vld [vmem:[#allocation8 + $0x8] sm:$0x1]
    %v251 = vld [vmem:[#allocation8 + $0x10] sm:$0xff]
    %v252 = vld [vmem:[#allocation8 + $0x18] sm:$0x1]
    %v253 = vld [vmem:[#allocation8 + $0x30] sm:$0x1]
    %v254 = vperm.slane %v253, 0
    %vm255 = vcmask 72704
    %v257 = vsel %vm255, %v248, 0
    %vm259 = vcmask 1040384
    %v261 = vsel %vm259, %v250, 0
    %263 = vmatpush.msra.mxu0 0.0
    %264 = vmatpush.msra.mxu0 0.0
    %265 = vmatpush.msra.mxu0 0.0
    %266 = vmatpush.msra.mxu0 0.0
    %267 = vmatpush.msra.mxu0 0.0
    %268 = vmatpush.msra.mxu0 0.0
    %269 = vmatpush.msra.mxu0 0.0
    %270 = vmatpush.msra.mxu0 0.0
    %271 = vmatpush.msra.mxu0 0.0
    %272 = vmatpush.msra.mxu0 0.0
    %273 = vmatpush.msra.mxu0 0.0
    %274 = vmatpush.msra.mxu0 0.0
    %275 = vmatpush.msra.mxu0 0.0
    %276 = vmatpush.msra.mxu0 0.0
    %277 = vmatpush.msra.mxu0 %v261
    %278 = vmatpush.msra.mxu0 %v249
    %279 = vmatmul.f32.gmra.mxu0 %v257
    %v280 = vpop.f32.mrf.mxu0
    %v281 = vadd.f32 %v254, %v280
    %282 = vdwg.mxu0
    %vm283 = vcmask 287744
    %284 = vst.msk [vmem:[#allocation2] sm:$0x3] %vm283, %v281
    %v285 = vlaneseq
    %v286 = vand.u32 %v285, 127
    %vm287 = vcmp.lt.s32.totalorder %v286, 27
    %v288 = vlaneseq
    %v289 = vshrl.u32 %v288, 7
    %v290 = vadd.s32 %v289, 8
    %vm291 = vcmp.eq.s32.totalorder %v289, %v286
    %vm292 = vcmp.eq.s32.totalorder %v290, %v286
    %v293 = vsel %vm291, 1, 0
    %v294 = vsel %vm292, 1, 0
    %v295 = vcvt.s32.f32 %v293
    %v296 = vcvt.s32.f32 %v294
    %v297 = vld [vmem:[#allocation2] sm:$0x1]
    %v298 = vmul.f32 %v295, 0.0
    %v299 = vmul.f32 %v296, 0.0
    %v300 = vsel %vm255, %v298, 0.0
    %301 = vadd.xlane.f32.xlu0 %v300
    %v302 = vpop.xlane.xlu0 %301
    %vm303 = vcmask 65536
    %v304 = vsel %vm303, %v299, 0.0
    %305 = vadd.xlane.f32.xlu0 %v304
    %v306 = vpop.xlane.xlu0 %305
    %v307 = vmul.f32 %v302, %v251
    %v308 = vmul.f32 %v306, %v252
    %vm309 = vcmask 293888
    %v310 = vsel %vm309, %v307, 0.0
    %vm311 = vcmask 286720
    %v312 = vsel %vm311, %v308, 0.0
    %v313 = vadd.f32 %v310, %v312
    %v314 = vrot.slane %v313, 4
    %v315 = vadd.f32 %v313, %v314
    %v316 = vrot.slane %v315, 2
    %v317 = vadd.f32 %v315, %v316
    %v318 = vrot.slane %v317, 1
    %v319 = vadd.f32 %v317, %v318
    %v320 = vadd.f32 %v297, %v319
    %v321 = vxor.u32 %v320, 2147483648
    %v322 = vmul.f32 %v321, 1.442695
    %v323 = vpow.pop %v322
    %v324 = vadd.f32 %v323, 1.0
    %v325 = vrcp.pop %v324
    %v326 = vmul.f32 %v324, %v325
    %v327 = vsub.f32 1.0, %v326
    %v328 = vmul.f32 %v325, %v327
    %v329 = vadd.f32 %v325, %v328
    %vm330 = vweird.f32 %v324
    %vm331 = vweird.f32 %v325
    %vm332 = vmor %vm330, %vm331
    %v333 = vsel %vm332, %v325, %v329
    %v334 = vand.u32 2147483647, %v324
    %vm335 = vcmp.eq.f32.partialorder %v334, 8.507059e+37
    %v336 = vand.u32 %v324, 2147483648
    %v337 = vor.u32 1.1754944e-38, %v336
    %v338 = vsel %vm335, %v337, %v333
    %v339 = vmul.f32 1.0, %v338
    %v340 = vtanh.pop %v320
    %v341 = vsel %vm287, %v339, %v340
    %v342 = vmul.f32 %v341, 0.0
    %344 = vrot.lane.b32.xlu0 %v341, 101
    %v345 = vpop.permute.xlu0 %344
    %v347 = vmul.f32 %v341, %v345
    %349 = vrot.lane.b32.xlu0 %v347, 9
    %v350 = vpop.permute.xlu0 %349
    %v352 = vadd.f32 %v342, %v350
    %v353 = vtanh.pop %v352
    %355 = vrot.lane.b32.xlu0 %v353, 9
    %v356 = vpop.permute.xlu0 %355
    %v358 = vmul.f32 %v341, %v356
    %v359 = vld [vmem:[#allocation2 + $0x1] sm:$0x1]
    %v360 = vperm.slane %v358, 0
    %363 = vrot.lane.b32.xlu0 %v295, 18
    %v364 = vpop.permute.xlu0 %363
    %365 = vrot.lane.b32.xlu0 %v296, 18
    %v366 = vpop.permute.xlu0 %365
    %v369 = vmul.f32 %v360, %v364
    %v370 = vmul.f32 %v360, %v366
    %373 = vrot.lane.b32.xlu0 %v369, 110
    %v374 = vpop.permute.xlu0 %373
    %375 = vrot.lane.b32.xlu0 %v370, 110
    %v376 = vpop.permute.xlu0 %375
    %v379 = vsel %vm255, %v374, 0.0
    %380 = vadd.xlane.f32.xlu0 %v379
    %v381 = vpop.xlane.xlu0 %380
    %v382 = vsel %vm303, %v376, 0.0
    %383 = vadd.xlane.f32.xlu0 %v382
    %v384 = vpop.xlane.xlu0 %383
    %v385 = vmul.f32 %v381, %v251
    %v386 = vmul.f32 %v384, %v252
    %v387 = vsel %vm309, %v385, 0.0
    %v388 = vsel %vm311, %v386, 0.0
    %v389 = vadd.f32 %v387, %v388
    %v390 = vrot.slane %v389, 4
    %v391 = vadd.f32 %v389, %v390
    %v392 = vrot.slane %v391, 2
    %v393 = vadd.f32 %v391, %v392
    %v394 = vrot.slane %v393, 1
    %v395 = vadd.f32 %v393, %v394
    %v396 = vadd.f32 %v359, %v395
    %v397 = vxor.u32 %v396, 2147483648
    %v398 = vmul.f32 %v397, 1.442695
    %v399 = vpow.pop %v398
    %v400 = vadd.f32 %v399, 1.0
    %v401 = vrcp.pop %v400
    %v402 = vmul.f32 %v400, %v401
    %v403 = vsub.f32 1.0, %v402
    %v404 = vmul.f32 %v401, %v403
    %v405 = vadd.f32 %v401, %v404
    %vm406 = vweird.f32 %v400
    %vm407 = vweird.f32 %v401
    %vm408 = vmor %vm406, %vm407
    %v409 = vsel %vm408, %v401, %v405
    %v410 = vand.u32 2147483647, %v400
    %vm411 = vcmp.eq.f32.partialorder %v410, 8.507059e+37
    %v412 = vand.u32 %v400, 2147483648
    %v413 = vor.u32 1.1754944e-38, %v412
    %v414 = vsel %vm411, %v413, %v409
    %v415 = vmul.f32 1.0, %v414
    %v416 = vtanh.pop %v396
    %v417 = vsel %vm287, %v415, %v416
    %v418 = vmul.f32 %v417, %v352
    %420 = vrot.lane.b32.xlu0 %v417, 101
    %v421 = vpop.permute.xlu0 %420
    %v423 = vmul.f32 %v417, %v421
    %425 = vrot.lane.b32.xlu0 %v423, 9
    %v426 = vpop.permute.xlu0 %425
    %v428 = vadd.f32 %v418, %v426
    %v429 = vtanh.pop %v428
    %431 = vrot.lane.b32.xlu0 %v429, 9
    %v432 = vpop.permute.xlu0 %431
    %v434 = vmul.f32 %v417, %v432
    %v435 = vmax.f32 %v434, 0.0
    %v436 = vld [vmem:[#allocation8 + $0x20] sm:$0xff]
    %v437 = vld [vmem:[#allocation8 + $0x28] sm:$0x1]
    %v438 = vld [vmem:[#allocation8 + $0x38] sm:$0x1]
    %440 = vrot.lane.b32.xlu0 %v435, 110
    %v441 = vpop.permute.xlu0 %440
    %v442 = vsel %vm255, %v441, 0
    %v445 = vsel %vm259, %v437, 0
    %447 = vmatpush.msra.mxu0 0.0
    %448 = vmatpush.msra.mxu0 0.0
    %449 = vmatpush.msra.mxu0 0.0
    %450 = vmatpush.msra.mxu0 0.0
    %451 = vmatpush.msra.mxu0 0.0
    %452 = vmatpush.msra.mxu0 0.0
    %453 = vmatpush.msra.mxu0 0.0
    %454 = vmatpush.msra.mxu0 0.0
    %455 = vmatpush.msra.mxu0 0.0
    %456 = vmatpush.msra.mxu0 0.0
    %457 = vmatpush.msra.mxu0 0.0
    %458 = vmatpush.msra.mxu0 0.0
    %459 = vmatpush.msra.mxu0 0.0
    %460 = vmatpush.msra.mxu0 0.0
    %461 = vmatpush.msra.mxu0 %v445
    %462 = vmatpush.msra.mxu0 %v436
    %463 = vmatmul.f32.gmra.mxu0 %v442
    %v464 = vpop.f32.mrf.mxu0
    %v465 = vadd.f32 %v438, %v464
    %466 = vdwg.mxu0
    %vm467 = vcmask 73728
    %468 = vst.msk [vmem:[#allocation9] sm:$0x1] %vm467, %v465
    // Predicated region
    $region26: #{tpu_custom_call.1} parent=1 // pred_check
      _
    $region27: #{tpu_custom_call.1} parent=1 // pred_check_branch
      %470 = sbr.rel (0) target = $region29
    $region28: #{tpu_custom_call.1} parent=1 // pred_region
      %472 = vsyncadd [#allocation5], 0
      %s474 = sshll.u32 [#allocation9], 4
      %s475 = int_to_ptr.vmem [resolvable:$true] %s474
      %s476 = sshll.u32 %s3, 4
      %s477 = int_to_ptr.hbm [resolvable:$true] %s476
      %479 = dma.vmem_to_hbm [thread:$0]  %s475, 16, %s477, [#allocation5]
    $region29: #{tpu_custom_call.1} parent=1 // pred_fallthru
      _
    // Predicated region
    $region30: #{tpu_custom_call.1} parent=1 // pred_check
      _
    $region31: #{tpu_custom_call.1} parent=1 // pred_check_branch
      %481 = sbr.rel (0) target = $region33
    $region32: #{tpu_custom_call.1} parent=1 // pred_region
      %483 = dma.done [#allocation5], 16
    $region33: #{tpu_custom_call.1} parent=1 // pred_fallthru
      _
    %484 = vsyncpa [#allocation4], 1
    %485 = vsyncpa [#allocation7], 1
    %486 = vsyncpa [#allocation5], 1

</llo_original>
